<compile_context>
chip_gen: v7x
topology: tpu7x:2x2x1
jax: 0.10.0
libtpu: 0.0.40
codegen_flags: <defaults>
</compile_context>

<pallas_src>
import jax
import jax.numpy as jnp
from jax.experimental import pallas as pl
from jax.experimental.pallas import tpu as pltpu


# --------------------------------------------------------------------------
# Hardware introspection helpers (best-effort; safe fallbacks everywhere).
# --------------------------------------------------------------------------
def _chip_class():
    try:
        kind = jax.devices()[0].device_kind.lower()
    except Exception:
        return "unknown"
    if "v7" in kind or "7x" in kind:
        return "v7"
    if "v6" in kind:
        return "v6"
    if "v5" in kind or "v4" in kind or "v3" in kind:
        return "v5"
    return "unknown"


def _vmem_capacity_bytes(chip):
    try:
        return int(pltpu.get_tpu_info().vmem_capacity_bytes)
    except Exception:
        # v7x has 64 MiB per TensorCore; v5e/v6e have 128 MiB.
        return (64 << 20) if chip in ("v7", "unknown") else (128 << 20)


# Per-input tile size: 2 MiB already hits ~85% of roofline on v5e/v6e; on v7x
# (3.2 TB/s) bigger tiles are needed to amortize the ~0.35 us per-step overhead.
_TARGET_TILE_BYTES = {"v5": 2 << 20, "v6": 4 << 20, "v7": 6 << 20, "unknown": 4 << 20}


# --------------------------------------------------------------------------
# Pallas core: streamed 2-D (rows, cols) weighted sum.
# --------------------------------------------------------------------------
def _weighted_sum_2d(x1, x2, w1, w2, compute_dtype, chip):
    rows, cols = x1.shape
    dtype = x1.dtype
    itemsize = jnp.dtype(dtype).itemsize
    # Sub-32-bit dtypes pack along sublanes; keep tile rows a multiple of the
    # packed sublane count so every load/store is a full vreg.
    sublane = {4: 8, 2: 16, 1: 32}.get(itemsize, 8)

    vmem_cap = _vmem_capacity_bytes(chip)
    vmem_budget = int(0.75 * vmem_cap)          # never promise more than the chip has
    # 3 streamed arrays (x1, x2, out) x double buffering + 2 MiB headroom.
    max_tile_bytes = max(cols * sublane * itemsize, (vmem_budget - (2 << 20)) // 6)
    target_tile_bytes = min(_TARGET_TILE_BYTES.get(chip, 4 << 20), max_tile_bytes)

    target_rows = max(sublane,
                      (target_tile_bytes // (cols * itemsize)) // sublane * sublane)
    tile_rows = target_rows
    if chip == "v7":
        # 2 TensorCores per chip: keep >= ~8 grid steps so the parallel grid
        # axis balances; no effect on the single-TC generations.
        balance_rows = max(sublane, (rows // 8) // sublane * sublane)
        tile_rows = min(tile_rows, balance_rows)
    if tile_rows >= rows:
        tile_rows = rows                         # single full-extent block
    grid_rows = pl.cdiv(rows, tile_rows)         # last block may be partial (masked)

    tile_bytes = tile_rows * cols * itemsize
    vmem_limit = int(min(max(16 << 20, 6 * tile_bytes + (2 << 20)), vmem_budget))

    # Scalar parameters as fixed 32-bit SMEM words regardless of input dtype.
    w = jnp.stack([jnp.asarray(w1, jnp.float32).reshape(()),
                   jnp.asarray(w2, jnp.float32).reshape(())])

    def kernel(w_ref, x1_ref, x2_ref, o_ref):
        a = w_ref[0].astype(compute_dtype)
        b = w_ref[1].astype(compute_dtype)
        o_ref[...] = (x1_ref[...].astype(compute_dtype) * a
                      + x2_ref[...].astype(compute_dtype) * b).astype(o_ref.dtype)

    n_elems = rows * cols
    return pl.pallas_call(
        kernel,
        out_shape=jax.ShapeDtypeStruct((rows, cols), dtype),
        grid_spec=pl.GridSpec(
            grid=(grid_rows,),
            in_specs=[
                pl.BlockSpec(memory_space=pltpu.SMEM),               # w1, w2 scalars
                pl.BlockSpec((tile_rows, cols), lambda i: (i, 0)),   # x1 tile
                pl.BlockSpec((tile_rows, cols), lambda i: (i, 0)),   # x2 tile
            ],
            out_specs=pl.BlockSpec((tile_rows, cols), lambda i: (i, 0)),
        ),
        compiler_params=pltpu.CompilerParams(
            dimension_semantics=("parallel",),
            vmem_limit_bytes=vmem_limit),
        cost_estimate=pl.CostEstimate(
            flops=3 * n_elems,
            transcendentals=0,
            bytes_accessed=3 * n_elems * itemsize),
    )(w, x1, x2)


# --------------------------------------------------------------------------
# Public wrapper: matches WeightedSum.forward(input1, input2).
# --------------------------------------------------------------------------
def weighted_sum(x1, x2, w1, w2, *, min_pallas_bytes=256 * 1024):
    """Elementwise x1*w1 + x2*w2 with scalar parameters."""
    assert x1.shape == x2.shape, "inputs must have the same shape"
    assert x1.dtype == x2.dtype, "inputs must have the same dtype"
    dtype = x1.dtype
    if not jnp.issubdtype(dtype, jnp.floating):
        raise TypeError("weighted_sum expects floating-point inputs")

    chip = _chip_class()
    # v6e/v7x have native bf16 VPUs; v5-class chips do not, so keep f32 math there.
    compute_dtype = dtype if (dtype == jnp.bfloat16 and chip in ("v6", "v7")) else jnp.float32

    def xla_path(a, b):
        # Same math (and same weight precision) as the Pallas path.
        return (a.astype(compute_dtype) * jnp.asarray(w1, compute_dtype)
                + b.astype(compute_dtype) * jnp.asarray(w2, compute_dtype)).astype(dtype)

    total = x1.size
    itemsize = jnp.dtype(dtype).itemsize

    # Tiny tensors: pallas_call fixed launch/DMA-setup cost dominates and XLA
    # fuses this elementwise op natively.
    if total == 0 or total * itemsize < min_pallas_bytes:
        return xla_path(x1, x2)

    # Pick the widest lane-dense column count that divides the element count so
    # the flatten/reshape is a free reinterpretation (no pad, no slice, no
    # extra HBM copies).  Ragged row counts are handled by a masked partial
    # last block in the grid.
    cols = None
    for c in (1024, 512, 256, 128):
        if total % c == 0:
            cols = c
            break
    if cols is None:
        # Element count not a multiple of 128: padding/slicing would re-copy the
        # whole tensors (~2.3x the HBM traffic of the op itself) and XLA's fused
        # elementwise kernel is already at HBM roofline for this streaming op.
        return xla_path(x1, x2)

    rows = total // cols
    out2d = _weighted_sum_2d(x1.reshape(rows, cols), x2.reshape(rows, cols),
                             w1, w2, compute_dtype, chip)
    return out2d.reshape(x1.shape)


if __name__ == "__main__":
    key = jax.random.PRNGKey(0)
    k1, k2, k3, k4, k5, k6 = jax.random.split(key, 6)

    # Deterministic scalar parameters (torch.FloatTensor(1) is uninitialized;
    # fixed values stand in for the learned parameters).
    w1 = jnp.float32(0.7)
    w2 = jnp.float32(0.3)

    # Small NCHW inputs consistent with the module's elementwise forward.
    # min_pallas_bytes=0 forces the Pallas path even at these small sizes.
    x1 = jax.random.normal(k1, (2, 4, 16, 16), dtype=jnp.float32)
    x2 = jax.random.normal(k2, (2, 4, 16, 16), dtype=jnp.float32)
    out = jax.block_until_ready(weighted_sum(x1, x2, w1, w2, min_pallas_bytes=0))
    ref = x1 * w1 + x2 * w2
    assert out.shape == x1.shape and out.dtype == x1.dtype
    assert jnp.allclose(out, ref, atol=1e-6, rtol=1e-6)

    # 19200 elements -> cols=256, rows=75: ragged row count exercises the
    # partial (masked) last block with zero padding/slicing.
    y1 = jax.random.normal(k3, (2, 4, 48, 50), dtype=jnp.float32)
    y2 = jax.random.normal(k4, (2, 4, 48, 50), dtype=jnp.float32)
    out2 = jax.block_until_ready(weighted_sum(y1, y2, w1, w2, min_pallas_bytes=0))
    ref2 = y1 * w1 + y2 * w2
    assert jnp.allclose(out2, ref2, atol=1e-6, rtol=1e-6)

    # bf16 inputs: native bf16 math on v6e/v7x, f32 math on v5-class chips.
    z1 = x1.astype(jnp.bfloat16)
    z2 = x2.astype(jnp.bfloat16)
    out3 = jax.block_until_ready(weighted_sum(z1, z2, w1, w2, min_pallas_bytes=0))
    ref3 = z1.astype(jnp.float32) * w1 + z2.astype(jnp.float32) * w2
    assert jnp.allclose(out3.astype(jnp.float32), ref3, atol=3e-2, rtol=3e-2)

    # Element count not a multiple of 128 -> fused-XLA fallback (no pad/slice copies).
    r1 = jax.random.normal(k5, (2, 4, 7, 5), dtype=jnp.float32)
    r2 = jax.random.normal(k6, (2, 4, 7, 5), dtype=jnp.float32)
    out4 = jax.block_until_ready(weighted_sum(r1, r2, w1, w2, min_pallas_bytes=0))
    ref4 = r1 * w1 + r2 * w2
    assert jnp.allclose(out4, ref4, atol=1e-6, rtol=1e-6)

    print("KERNEL_OK")
</pallas_src>

<mosaic_0001>
module attributes {stable_mosaic.version = 11 : i64} {
  func.func @kernel(%arg0: i32, %arg1: memref<2xf32, #tpu.memory_space<smem>>, %arg2: memref<2x1024xf32, #tpu.memory_space<vmem>>, %arg3: memref<2x1024xf32, #tpu.memory_space<vmem>>, %arg4: memref<2x1024xf32, #tpu.memory_space<vmem>>) attributes {dimension_semantics = [#tpu.dimension_semantics<parallel>], iteration_bounds = array<i64: 1>, scalar_prefetch = 0 : i64, scratch_operands = 0 : i64, tpu.core_type = #tpu.core_type<tc>, window_params = [{transform_indices = @transform_0, window_bounds = array<i64: 2>}, {transform_indices = @transform_1, window_bounds = array<i64: 2, 1024>}, {transform_indices = @transform_2, window_bounds = array<i64: 2, 1024>}, {transform_indices = @transform_3, window_bounds = array<i64: 2, 1024>}]} {
    %c0 = arith.constant 0 : index
    %0 = memref.load %arg1[%c0] : memref<2xf32, #tpu.memory_space<smem>>
    %c1 = arith.constant 1 : index
    %1 = memref.load %arg1[%c1] : memref<2xf32, #tpu.memory_space<smem>>
    %c0_0 = arith.constant 0 : index
    %c0_1 = arith.constant 0 : index
    %2 = vector.load %arg2[%c0_0, %c0_1] : memref<2x1024xf32, #tpu.memory_space<vmem>>, vector<2x1024xf32>
    %3 = vector.broadcast %0 : f32 to vector<2x1024xf32>
    %4 = arith.mulf %2, %3 : vector<2x1024xf32>
    %c0_2 = arith.constant 0 : index
    %c0_3 = arith.constant 0 : index
    %5 = vector.load %arg3[%c0_2, %c0_3] : memref<2x1024xf32, #tpu.memory_space<vmem>>, vector<2x1024xf32>
    %6 = vector.broadcast %1 : f32 to vector<2x1024xf32>
    %7 = arith.mulf %5, %6 : vector<2x1024xf32>
    %8 = arith.addf %4, %7 : vector<2x1024xf32>
    %c0_4 = arith.constant 0 : index
    %c0_5 = arith.constant 0 : index
    %9 = vector.load %arg4[%c0_4, %c0_5] : memref<2x1024xf32, #tpu.memory_space<vmem>>, vector<2x1024xf32>
    tpu.vector_store %arg4[%c0_4, %c0_5], %8 {strides = array<i32>} : memref<2x1024xf32, #tpu.memory_space<vmem>>, vector<2x1024xf32>,
    return
  }
  func.func @transform_0(%arg0: i32) -> i32 {
    %c0_i32 = arith.constant 0 : i32
    %c0_i32_0 = arith.constant 0 : i32
    return %c0_i32 : i32
  }
  func.func @transform_1(%arg0: i32) -> (i32, i32) {
    %c0_i32 = arith.constant 0 : i32
    %c0_i32_0 = arith.constant 0 : i32
    return %arg0, %c0_i32 : i32, i32
  }
  func.func @transform_2(%arg0: i32) -> (i32, i32) {
    %c0_i32 = arith.constant 0 : i32
    %c0_i32_0 = arith.constant 0 : i32
    return %arg0, %c0_i32 : i32, i32
  }
  func.func @transform_3(%arg0: i32) -> (i32, i32) {
    %c0_i32 = arith.constant 0 : i32
    %c0_i32_0 = arith.constant 0 : i32
    return %arg0, %c0_i32 : i32, i32
  }
}

</mosaic_0001>

<llo_original>
// kernel: tpu_custom_call.1
$region0: #{tpu_custom_call.1}
  #allocation0 [shape = 'u32[]', space=smem, size = 0x4, offset = 0x4, fixed_abs, tag = 'smem constant byte address 0x4 - core index']
  #allocation1 [shape = 'u32[144,128]{1,0:T(1,128)}', space=vmem, size = 0x12000, scoped, tag = 'internal scratch']
  %s0 = inlined_call_operand.hbm [shape: f32[2], index: 0, kind: input, shape index: {}]
  %s1 = inlined_call_operand.hbm [shape: f32[2,1024], index: 1, kind: input, shape index: {}]
  %s2 = inlined_call_operand.hbm [shape: f32[2,1024], index: 2, kind: input, shape index: {}]
  %s3 = inlined_call_operand.hbm [shape: f32[2,1024], index: 3, kind: output, shape index: {}]
  %s4 = sld [smem:[#allocation0]]
  $region34: #{tpu_custom_call.1} parent=0
    _
  %s6 = ssub.s32 1, %s4
  %s7 = scalar_select 0, %s6, %s4
  $region1: #{tpu_custom_call.1} parent=0
    #allocation2 [shape = 'u8[512]{0}', space=smem, size = 0x200, scoped, tag = 'input window, operand 0, single buffered']
    #allocation3 [shape = 's32[1]{0}', space=sflag, size = 0x4, scoped, tag = 'scoped memory for tpu_custom_call.1']
    #allocation4 [shape = 's32[1]{0}', space=sflag, size = 0x4, scoped, tag = 'scoped memory for tpu_custom_call.1']
    #allocation5 [shape = 's32[1]{0}', space=sflag, size = 0x4, scoped, tag = 'scoped memory for tpu_custom_call.1']
    #allocation6 [shape = 'u8[8192]{0}', space=vmem, size = 0x2000, scoped, tag = 'input window, operand 1, single buffered']
    #allocation7 [shape = 'u8[8192]{0}', space=vmem, size = 0x2000, scoped, tag = 'input window, operand 2, single buffered']
    #allocation8 [shape = 's32[1]{0}', space=sflag, size = 0x4, scoped, tag = 'scoped memory for tpu_custom_call.1']
    #allocation9 [shape = 'u8[8192]{0}', space=vmem, size = 0x2000, scoped, tag = 'output window, operand 0, single buffered']
    %8 = vsyncpa [#allocation5], 0
    %9 = vsyncpa [#allocation3], 0
    %10 = vsyncpa [#allocation8], 0
    %11 = vsyncpa [#allocation4], 0
    // Predicated region
    $region2: #{tpu_custom_call.1} parent=1 // pred_check
      _
    $region3: #{tpu_custom_call.1} parent=1 // pred_check_branch
      %13 = sbr.rel (0) target = $region5
    $region4: #{tpu_custom_call.1} parent=1 // pred_region
      %s15 = ssub.s32 16, 16
      %16 = vsyncadd [#allocation5], %s15
      %19 = dma.hbm_to_smem %s0, 16, [#allocation2], [#allocation5]
    $region5: #{tpu_custom_call.1} parent=1 // pred_fallthru
      _
    // Predicated region
    $region6: #{tpu_custom_call.1} parent=1 // pred_check
      _
    $region7: #{tpu_custom_call.1} parent=1 // pred_check_branch
      %21 = sbr.rel (0) target = $region9
    $region8: #{tpu_custom_call.1} parent=1 // pred_region
      %s23 = ssub.s32 256, 256
      %24 = vsyncadd [#allocation3], %s23
      %s26 = sshll.u32 [#allocation6], 4
      %s27 = int_to_ptr.vmem [resolvable:$true] %s26
      %29 = dma.hbm_to_vmem [thread:$0]  %s1, 256, %s27, [#allocation3]
    $region9: #{tpu_custom_call.1} parent=1 // pred_fallthru
      _
    // Predicated region
    $region10: #{tpu_custom_call.1} parent=1 // pred_check
      _
    $region11: #{tpu_custom_call.1} parent=1 // pred_check_branch
      %31 = sbr.rel (0) target = $region13
    $region12: #{tpu_custom_call.1} parent=1 // pred_region
      %s33 = ssub.s32 256, 256
      %34 = vsyncadd [#allocation8], %s33
      %s36 = sshll.u32 [#allocation7], 4
      %s37 = int_to_ptr.vmem [resolvable:$true] %s36
      %39 = dma.hbm_to_vmem [thread:$0]  %s2, 256, %s37, [#allocation8]
    $region13: #{tpu_custom_call.1} parent=1 // pred_fallthru
      _
    // Predicated region
    $region14: #{tpu_custom_call.1} parent=1 // pred_check
      _
    $region15: #{tpu_custom_call.1} parent=1 // pred_check_branch
      %41 = sbr.rel (0) target = $region17
    $region16: #{tpu_custom_call.1} parent=1 // pred_region
      %42 = dma.done [#allocation5], 16
    $region17: #{tpu_custom_call.1} parent=1 // pred_fallthru
      _
    // Predicated region
    $region18: #{tpu_custom_call.1} parent=1 // pred_check
      _
    $region19: #{tpu_custom_call.1} parent=1 // pred_check_branch
      %44 = sbr.rel (0) target = $region21
    $region20: #{tpu_custom_call.1} parent=1 // pred_region
      %45 = dma.done [#allocation3], 256
    $region21: #{tpu_custom_call.1} parent=1 // pred_fallthru
      _
    // Predicated region
    $region22: #{tpu_custom_call.1} parent=1 // pred_check
      _
    $region23: #{tpu_custom_call.1} parent=1 // pred_check_branch
      %47 = sbr.rel (0) target = $region25
    $region24: #{tpu_custom_call.1} parent=1 // pred_region
      %48 = dma.done [#allocation8], 256
    $region25: #{tpu_custom_call.1} parent=1 // pred_fallthru
      _
    %49 = sfence
    %s50 = sld [smem:[#allocation2]]
    %s51 = sld [smem:[#allocation2 + $0x1]]
    %v52 = vld [vmem:[#allocation6] sm:$0xff]
    %v53 = vld [vmem:[#allocation6 + $0x8] sm:$0xff]
    %v54 = vstv %s50
    %v55 = vmul.f32 %v52, %v54
    %v56 = vmul.f32 %v53, %v54
    %v57 = vld [vmem:[#allocation7] sm:$0xff]
    %v58 = vld [vmem:[#allocation7 + $0x8] sm:$0xff]
    %v59 = vstv %s51
    %v60 = vmul.f32 %v57, %v59
    %v61 = vmul.f32 %v58, %v59
    %v62 = vadd.f32 %v55, %v60
    %v63 = vadd.f32 %v56, %v61
    %64 = vst [vmem:[#allocation9] sm:$0xff] %v62
    %65 = vst [vmem:[#allocation9 + $0x8] sm:$0xff] %v63
    // Predicated region
    $region26: #{tpu_custom_call.1} parent=1 // pred_check
      _
    $region27: #{tpu_custom_call.1} parent=1 // pred_check_branch
      %67 = sbr.rel (0) target = $region29
    $region28: #{tpu_custom_call.1} parent=1 // pred_region
      %s69 = ssub.s32 256, 256
      %70 = vsyncadd [#allocation4], %s69
      %s72 = sshll.u32 [#allocation9], 4
      %s73 = int_to_ptr.vmem [resolvable:$true] %s72
      %75 = dma.vmem_to_hbm [thread:$0]  %s73, 256, %s3, [#allocation4]
    $region29: #{tpu_custom_call.1} parent=1 // pred_fallthru
      _
    // Predicated region
    $region30: #{tpu_custom_call.1} parent=1 // pred_check
      _
    $region31: #{tpu_custom_call.1} parent=1 // pred_check_branch
      %77 = sbr.rel (0) target = $region33
    $region32: #{tpu_custom_call.1} parent=1 // pred_region
      %78 = dma.done [#allocation4], 256
    $region33: #{tpu_custom_call.1} parent=1 // pred_fallthru
      _
    %79 = vsyncpa [#allocation3], 1
    %80 = vsyncpa [#allocation8], 1
    %81 = vsyncpa [#allocation4], 1
    %82 = vsyncpa [#allocation5], 1

</llo_original>
